<compile_context>
chip_gen: v7x
topology: tpu7x:2x2x1
jax: 0.10.0
libtpu: 0.0.40
codegen_flags: <defaults>
</compile_context>

<pallas_src>
import functools

import jax
import jax.numpy as jnp
from jax.experimental import pallas as pl
from jax.experimental.pallas import tpu as pltpu


def _round_up(v, m):
    return ((v + m - 1) // m) * m


def attention_unit_kernel(x_ref, s_ref, xw_ref, sw_ref, b_ref, ww_ref, out_ref,
                          *, ew_dtype):
    # x_ref : (Bb*T, xDim_p) f32      s_ref : (Bb, sDim_p) f32
    # xw    : (xDim_p, attDim_p) bf16  sw   : (sDim_p, attDim_p) bf16
    # b     : (1, attDim_p) f32  (= xEmbed.bias + sEmbed.bias, fused)
    # ww    : (1, attDim_p) f32  (wEmbed weight; wEmbed bias dropped: softmax
    #                             over T is invariant to a per-row constant)
    # out   : (Bb, T) f32        (lane axis = T)
    Bb, T = out_ref.shape
    attDim = xw_ref.shape[1]

    # In-kernel bf16 cast of the f32 DMA'd operands (VPU work hidden under the
    # DMA; avoids an extra f32->bf16 HBM pass in the wrapper).
    x_bf = x_ref[...].astype(jnp.bfloat16)
    s_bf = s_ref[...].astype(jnp.bfloat16)

    # --- xEmbed: one fused (Bb*T, xDim_p) @ (xDim_p, attDim_p) MXU matmul ----
    x_proj = jnp.dot(x_bf, xw_ref[...],
                     preferred_element_type=jnp.float32)            # (Bb*T, attDim)
    # T is a multiple of 8 (sublane), so this reshape is layout-preserving.
    x_proj = x_proj.reshape(Bb, T, attDim)

    # --- sEmbed + fused (xb + sb) bias, added once on the small (Bb, attDim) -
    s_proj = jnp.dot(s_bf, sw_ref[...],
                     preferred_element_type=jnp.float32) + b_ref[...]   # (Bb, attDim)

    # --- tanh / wEmbed multiply / lane reduce: bf16 on v6e/v7x, f32 on v5e ---
    pre = (x_proj + s_proj[:, None, :]).astype(ew_dtype)             # (Bb, T, attDim)
    sum_tanh = jnp.tanh(pre)
    w = ww_ref[...].astype(ew_dtype)
    v = jnp.sum(sum_tanh * w, axis=-1).astype(jnp.float32)           # (Bb, T)

    # --- numerically-stable softmax over T (lane axis); exact divide ---------
    m = jnp.max(v, axis=-1, keepdims=True)
    e = jnp.exp(v - m)
    l = jnp.sum(e, axis=-1, keepdims=True)
    out_ref[...] = (e / l).astype(out_ref.dtype)


def _vmem_budget_bytes():
    # Stay well below the default scoped-VMEM limit (32 MiB on v6e/v7x) and
    # below half of physical VMEM (64 MiB on v7x) so the compiler-allocated
    # f32 intermediate has headroom.
    try:
        cap = pltpu.get_tpu_info().vmem_capacity_bytes
    except Exception:
        cap = 64 << 20
    return min(24 << 20, cap // 2)


def _pick_block_b(B, T, xDim_p, sDim_p, attDim_p, weights_bytes,
                  *, min_slab_bytes=1 << 20):
    """VMEM- and size-aware batch block.

    Largest bb (divisor of B, sublane-aligned or == B) whose per-step working
    set fits the scoped-VMEM budget.  Only split below full-B (so v7x's two
    TensorCores can share the 'parallel' grid axis) when each step still moves
    a sizeable x slab; splitting a tiny problem just multiplies the ~0.35 us
    fixed per-step overhead.
    """
    budget = _vmem_budget_bytes()

    def step_bytes(bb):
        x_slab = bb * T * xDim_p * 4          # f32 input slab (one buffer)
        s_slab = bb * sDim_p * 4
        out_slab = bb * T * 4
        interm = bb * T * attDim_p * 4        # compiler-allocated f32 intermediate
        return 2 * (x_slab + s_slab + out_slab) + interm + 2 * weights_bytes

    cands = [bb for bb in range(B, 0, -1)
             if B % bb == 0 and (bb == B or bb % 8 == 0)
             and step_bytes(bb) <= budget]
    if not cands:
        # TODO(synk): add a T-tiling grid axis (two-pass / online softmax) for
        # sequences too long for a single (bb*T, xDim) slab; this binds first
        # on v7x (64 MiB VMEM).
        return 8 if B % 8 == 0 else 1
    bb = cands[0]
    if bb == B:
        split = [c for c in cands
                 if B // c >= 2 and c * T * xDim_p * 4 >= min_slab_bytes]
        if split:
            bb = split[0]
    return bb


def _default_elementwise_dtype():
    # v6e/v7x have bf16 VALU/EUP paths; v5e (and unknown chips) stay f32 where
    # a bf16 intermediate would only add pack/unpack casts.
    try:
        kind = jax.devices()[0].device_kind.lower()
    except Exception:
        return jnp.float32
    if "v6" in kind or "v7" in kind:
        return jnp.bfloat16
    return jnp.float32


def attention_unit(x, s_prev, params, *, block_b=None, elementwise_dtype=None):
    """x: (B, T, xDim) f32; s_prev: (1, B, sDim) f32; returns alpha: (B, T) f32."""
    B, T, xDim = x.shape
    sDim = s_prev.shape[-1]
    attDim = params["xw"].shape[1]
    assert T % 8 == 0, "T must be a multiple of 8 (sublane-aligned reshape)"
    # TODO(synk): support non-multiple-of-8 T by padding T and masking the
    # padded columns with -inf before the softmax.

    xDim_p = _round_up(xDim, 128)
    sDim_p = _round_up(sDim, 128)
    attDim_p = _round_up(attDim, 128)

    # Zero-pad sub-128 feature dims once (numerically exact: padded x/s columns
    # hit zero weight rows; padded attDim columns give tanh(0) * 0 = 0 in the
    # lane reduce).  Skipped entirely when the dims are already lane-aligned.
    if xDim_p != xDim:
        x = jnp.pad(x, ((0, 0), (0, 0), (0, xDim_p - xDim)))
    s = s_prev.reshape(B, sDim)                      # sPrev.squeeze(0)
    if sDim_p != sDim:
        s = jnp.pad(s, ((0, 0), (0, sDim_p - sDim)))

    def pad2(w, rows, cols):
        return jnp.pad(w, ((0, rows - w.shape[0]), (0, cols - w.shape[1])))

    # Weights are tiny and constant across grid steps: pad / cast in the wrapper.
    xw = pad2(params["xw"], xDim_p, attDim_p).astype(jnp.bfloat16)
    sw = pad2(params["sw"], sDim_p, attDim_p).astype(jnp.bfloat16)
    bias = pad2(params["xb"] + params["sb"], 1, attDim_p)    # fused bias, f32
    ww = pad2(params["ww"], 1, attDim_p)                      # f32
    # params["wb"] intentionally unused in the kernel: softmax over T is
    # invariant to adding the same scalar to every element of a row.

    # x / s stay f32 here; the bf16 cast happens in-kernel (no extra HBM copy
    # of the dominant operand).  The flattening reshape is a free metadata op.
    x2 = x.reshape(B * T, xDim_p)

    weights_bytes = xw.size * 2 + sw.size * 2 + (bias.size + ww.size) * 4
    bb = (_pick_block_b(B, T, xDim_p, sDim_p, attDim_p, weights_bytes)
          if block_b is None else block_b)
    assert B % bb == 0, "batch block must divide B"
    assert bb % 8 == 0 or bb == B, "batch block must be sublane-aligned or full B"

    ew_dtype = (_default_elementwise_dtype()
                if elementwise_dtype is None else elementwise_dtype)

    cost = pl.CostEstimate(
        flops=int(2 * B * T * xDim_p * attDim_p + 2 * B * sDim_p * attDim_p
                  + 3 * B * T * attDim_p),
        transcendentals=int(B * T * (attDim_p + 1)),           # tanh + exp
        bytes_accessed=int(x2.size * 4 + s.size * 4 + weights_bytes + B * T * 4),
    )

    out = pl.pallas_call(
        functools.partial(attention_unit_kernel, ew_dtype=ew_dtype),
        out_shape=jax.ShapeDtypeStruct((B, T), jnp.float32),
        grid=(B // bb,),
        in_specs=[
            pl.BlockSpec((bb * T, xDim_p), lambda b: (b, 0)),    # x (flattened), f32
            pl.BlockSpec((bb, sDim_p), lambda b: (b, 0)),        # sPrev, f32
            pl.BlockSpec((xDim_p, attDim_p), lambda b: (0, 0)),  # xEmbed W (in, out)
            pl.BlockSpec((sDim_p, attDim_p), lambda b: (0, 0)),  # sEmbed W (in, out)
            pl.BlockSpec((1, attDim_p), lambda b: (0, 0)),       # fused bias xb+sb
            pl.BlockSpec((1, attDim_p), lambda b: (0, 0)),       # wEmbed W
        ],
        out_specs=pl.BlockSpec((bb, T), lambda b: (b, 0)),       # alpha, T on lanes
        compiler_params=pltpu.CompilerParams(
            dimension_semantics=("parallel",)),
        cost_estimate=cost,
    )(x2, s, xw, sw, bias, ww)
    return out


def attention_unit_ref(x, s_prev, params):
    """Plain-JAX (f32) reference matching the PyTorch forward semantics."""
    B, T, _ = x.shape
    s = s_prev.reshape(B, -1)
    x_proj = x @ params["xw"] + params["xb"]                        # (B, T, attDim)
    s_proj = s @ params["sw"] + params["sb"]                        # (B, attDim)
    sum_tanh = jnp.tanh(x_proj + s_proj[:, None, :])
    v = jnp.einsum("bta,a->bt", sum_tanh, params["ww"][0]) + params["wb"][0, 0]
    return jax.nn.softmax(v, axis=1)


def make_params(key, sDim, xDim, attDim):
    # Mirrors init_weights(): normal(std=0.01) weights, zero biases.
    # xw/sw stored pre-transposed as (in_features, out_features); ww in the
    # PyTorch (out=1, in=attDim) layout.
    k1, k2, k3 = jax.random.split(key, 3)
    return {
        "sw": 0.01 * jax.random.normal(k1, (sDim, attDim), jnp.float32),
        "sb": jnp.zeros((1, attDim), jnp.float32),
        "xw": 0.01 * jax.random.normal(k2, (xDim, attDim), jnp.float32),
        "xb": jnp.zeros((1, attDim), jnp.float32),
        "ww": 0.01 * jax.random.normal(k3, (1, attDim), jnp.float32),
        "wb": jnp.zeros((1, 1), jnp.float32),
    }


if __name__ == "__main__":
    B, T, sDim, xDim, attDim = 16, 8, 32, 32, 32

    key = jax.random.PRNGKey(0)
    kp, kx, ks = jax.random.split(key, 3)
    params = make_params(kp, sDim, xDim, attDim)
    x = jax.random.normal(kx, (B, T, xDim), jnp.float32)
    s_prev = jax.random.normal(ks, (1, B, sDim), jnp.float32)

    alpha = jax.block_until_ready(attention_unit(x, s_prev, params))
    alpha_ref = attention_unit_ref(x, s_prev, params)

    assert alpha.shape == (B, T)
    max_err = jnp.max(jnp.abs(alpha - alpha_ref))
    # bf16 MXU inputs (and a bf16 tanh stage on v6e/v7x) vs the f32 reference.
    assert jnp.allclose(alpha, alpha_ref, atol=5e-3, rtol=5e-2), (
        f"max abs err {max_err}")
    # Exact divide in the softmax => rows sum to 1 up to f32 rounding.
    assert jnp.allclose(jnp.sum(alpha, axis=1), jnp.ones((B,)), atol=1e-5)

    print("KERNEL_OK")
</pallas_src>

<mosaic_0001>
module attributes {stable_mosaic.version = 11 : i64} {
  func.func @attention_unit_kernel(%arg0: i32, %arg1: memref<128x128xf32, #tpu.memory_space<vmem>>, %arg2: memref<16x128xf32, #tpu.memory_space<vmem>>, %arg3: memref<128x128xbf16, #tpu.memory_space<vmem>>, %arg4: memref<128x128xbf16, #tpu.memory_space<vmem>>, %arg5: memref<1x128xf32, #tpu.memory_space<vmem>>, %arg6: memref<1x128xf32, #tpu.memory_space<vmem>>, %arg7: memref<16x8xf32, #tpu.memory_space<vmem>>) attributes {dimension_semantics = [#tpu.dimension_semantics<parallel>], iteration_bounds = array<i64: 1>, scalar_prefetch = 0 : i64, scratch_operands = 0 : i64, tpu.core_type = #tpu.core_type<tc>, window_params = [{transform_indices = @transform_0, window_bounds = array<i64: 128, 128>}, {transform_indices = @transform_1, window_bounds = array<i64: 16, 128>}, {pipeline_mode = #tpu.pipeline_mode<synchronous>, transform_indices = @transform_2, window_bounds = array<i64: 128, 128>}, {pipeline_mode = #tpu.pipeline_mode<synchronous>, transform_indices = @transform_3, window_bounds = array<i64: 128, 128>}, {pipeline_mode = #tpu.pipeline_mode<synchronous>, transform_indices = @transform_4, window_bounds = array<i64: 1, 128>}, {pipeline_mode = #tpu.pipeline_mode<synchronous>, transform_indices = @transform_5, window_bounds = array<i64: 1, 128>}, {transform_indices = @transform_6, window_bounds = array<i64: 16, 8>}]} {
    %c0 = arith.constant 0 : index
    %c0_0 = arith.constant 0 : index
    %0 = vector.load %arg1[%c0, %c0_0] : memref<128x128xf32, #tpu.memory_space<vmem>>, vector<128x128xf32>
    %1 = arith.truncf %0 : vector<128x128xf32> to vector<128x128xbf16>
    %c0_1 = arith.constant 0 : index
    %c0_2 = arith.constant 0 : index
    %2 = vector.load %arg2[%c0_1, %c0_2] : memref<16x128xf32, #tpu.memory_space<vmem>>, vector<16x128xf32>
    %3 = arith.truncf %2 : vector<16x128xf32> to vector<16x128xbf16>
    %c0_3 = arith.constant 0 : index
    %c0_4 = arith.constant 0 : index
    %4 = vector.load %arg3[%c0_3, %c0_4] : memref<128x128xbf16, #tpu.memory_space<vmem>>, vector<128x128xbf16>
    %cst = arith.constant dense<0.000000e+00> : vector<128x128xf32>
    %5 = tpu.matmul %1, %4, %cst {dimension_numbers = #tpu.dot_dimension_numbers<[1], [0], [0], [1], [0, 0, 1, 1], [], []>} : vector<128x128xbf16>, vector<128x128xbf16>, vector<128x128xf32> -> vector<128x128xf32>
    %6 = vector.shape_cast %5 : vector<128x128xf32> to vector<16x8x128xf32>
    %c0_5 = arith.constant 0 : index
    %c0_6 = arith.constant 0 : index
    %7 = vector.load %arg4[%c0_5, %c0_6] : memref<128x128xbf16, #tpu.memory_space<vmem>>, vector<128x128xbf16>
    %cst_7 = arith.constant dense<0.000000e+00> : vector<16x128xf32>
    %8 = tpu.matmul %3, %7, %cst_7 {dimension_numbers = #tpu.dot_dimension_numbers<[1], [0], [0], [1], [0, 0, 1, 1], [], []>} : vector<16x128xbf16>, vector<128x128xbf16>, vector<16x128xf32> -> vector<16x128xf32>
    %c0_8 = arith.constant 0 : index
    %c0_9 = arith.constant 0 : index
    %9 = vector.load %arg5[%c0_8, %c0_9] : memref<1x128xf32, #tpu.memory_space<vmem>>, vector<1x128xf32>
    %10 = vector.broadcast %9 : vector<1x128xf32> to vector<16x128xf32>
    %11 = arith.addf %8, %10 : vector<16x128xf32>
    %12 = vector.shape_cast %11 : vector<16x128xf32> to vector<16x1x128xf32>
    %13 = vector.broadcast %12 : vector<16x1x128xf32> to vector<16x8x128xf32>
    %14 = arith.addf %6, %13 : vector<16x8x128xf32>
    %15 = math.tanh %14 : vector<16x8x128xf32>
    %c0_10 = arith.constant 0 : index
    %c0_11 = arith.constant 0 : index
    %16 = vector.load %arg6[%c0_10, %c0_11] : memref<1x128xf32, #tpu.memory_space<vmem>>, vector<1x128xf32>
    %17 = vector.shape_cast %16 : vector<1x128xf32> to vector<1x1x128xf32>
    %18 = vector.broadcast %17 : vector<1x1x128xf32> to vector<16x8x128xf32>
    %19 = arith.mulf %15, %18 : vector<16x8x128xf32>
    %cst_12 = arith.constant dense<0.000000e+00> : vector<16x8xf32>
    %20 = vector.multi_reduction <add>, %19, %cst_12 [2] : vector<16x8x128xf32> to vector<16x8xf32>
    %cst_13 = arith.constant dense<0xFF800000> : vector<16xf32>
    %21 = vector.multi_reduction <maximumf>, %20, %cst_13 [1] : vector<16x8xf32> to vector<16xf32>
    %22 = vector.shape_cast %21 : vector<16xf32> to vector<16x1xf32>
    %23 = vector.broadcast %22 : vector<16x1xf32> to vector<16x8xf32>
    %24 = arith.subf %20, %23 : vector<16x8xf32>
    %25 = math.exp %24 : vector<16x8xf32>
    %cst_14 = arith.constant dense<0.000000e+00> : vector<16xf32>
    %26 = vector.multi_reduction <add>, %25, %cst_14 [1] : vector<16x8xf32> to vector<16xf32>
    %27 = vector.shape_cast %26 : vector<16xf32> to vector<16x1xf32>
    %28 = vector.broadcast %27 : vector<16x1xf32> to vector<16x8xf32>
    %29 = arith.divf %25, %28 : vector<16x8xf32>
    %c0_15 = arith.constant 0 : index
    %c0_16 = arith.constant 0 : index
    %30 = vector.load %arg7[%c0_15, %c0_16] : memref<16x8xf32, #tpu.memory_space<vmem>>, vector<16x8xf32>
    tpu.vector_store %arg7[%c0_15, %c0_16], %29 {strides = array<i32>} : memref<16x8xf32, #tpu.memory_space<vmem>>, vector<16x8xf32>,
    return
  }
  func.func @transform_0(%arg0: i32) -> (i32, i32) {
    %c0_i32 = arith.constant 0 : i32
    %c0_i32_0 = arith.constant 0 : i32
    return %arg0, %c0_i32 : i32, i32
  }
  func.func @transform_1(%arg0: i32) -> (i32, i32) {
    %c0_i32 = arith.constant 0 : i32
    %c0_i32_0 = arith.constant 0 : i32
    return %arg0, %c0_i32 : i32, i32
  }
  func.func @transform_2(%arg0: i32) -> (i32, i32) {
    %c0_i32 = arith.constant 0 : i32
    %c0_i32_0 = arith.constant 0 : i32
    %c0_i32_1 = arith.constant 0 : i32
    return %c0_i32, %c0_i32_0 : i32, i32
  }
  func.func @transform_3(%arg0: i32) -> (i32, i32) {
    %c0_i32 = arith.constant 0 : i32
    %c0_i32_0 = arith.constant 0 : i32
    %c0_i32_1 = arith.constant 0 : i32
    return %c0_i32, %c0_i32_0 : i32, i32
  }
  func.func @transform_4(%arg0: i32) -> (i32, i32) {
    %c0_i32 = arith.constant 0 : i32
    %c0_i32_0 = arith.constant 0 : i32
    %c0_i32_1 = arith.constant 0 : i32
    return %c0_i32, %c0_i32_0 : i32, i32
  }
  func.func @transform_5(%arg0: i32) -> (i32, i32) {
    %c0_i32 = arith.constant 0 : i32
    %c0_i32_0 = arith.constant 0 : i32
    %c0_i32_1 = arith.constant 0 : i32
    return %c0_i32, %c0_i32_0 : i32, i32
  }
  func.func @transform_6(%arg0: i32) -> (i32, i32) {
    %c0_i32 = arith.constant 0 : i32
    %c0_i32_0 = arith.constant 0 : i32
    return %arg0, %c0_i32 : i32, i32
  }
}

</mosaic_0001>

<llo_original>
// kernel: tpu_custom_call.1
$region0: #{tpu_custom_call.1}
  #allocation0 [shape = 'u32[]', space=smem, size = 0x4, offset = 0x4, fixed_abs, tag = 'smem constant byte address 0x4 - core index']
  #allocation1 [shape = 'u32[144,128]{1,0:T(1,128)}', space=vmem, size = 0x12000, scoped, tag = 'internal scratch']
  %s0 = inlined_call_operand.hbm [shape: f32[128,128], index: 0, kind: input, shape index: {}]
  %s1 = inlined_call_operand.hbm [shape: f32[16,128], index: 1, kind: input, shape index: {}]
  %s2 = inlined_call_operand.hbm [shape: bf16[128,128], index: 2, kind: input, shape index: {}]
  %s3 = inlined_call_operand.hbm [shape: bf16[128,128], index: 3, kind: input, shape index: {}]
  %s4 = inlined_call_operand.vmem [shape: f32[1,128], index: 4, kind: input, shape index: {}]
  %s5 = inlined_call_operand.vmem [shape: f32[1,128], index: 5, kind: input, shape index: {}]
  %s6 = inlined_call_operand.vmem [shape: f32[16,8], index: 6, kind: output, shape index: {}]
  %s7 = sld [smem:[#allocation0]]
  $region50: #{tpu_custom_call.1} parent=0
    _
  %s9 = ssub.s32 1, %s7
  %s10 = scalar_select 0, %s9, %s7
  $region1: #{tpu_custom_call.1} parent=0
    #allocation2 [shape = 'u8[65536]{0}', space=vmem, size = 0x10000, scoped, tag = 'input window, operand 0, single buffered']
    #allocation3 [shape = 's32[1]{0}', space=sflag, size = 0x4, scoped, tag = 'scoped memory for tpu_custom_call.1']
    #allocation4 [shape = 'u8[8192]{0}', space=vmem, size = 0x2000, scoped, tag = 'input window, operand 1, single buffered']
    #allocation5 [shape = 's32[1]{0}', space=sflag, size = 0x4, scoped, tag = 'scoped memory for tpu_custom_call.1']
    #allocation6 [shape = 'u8[32768]{0}', space=vmem, size = 0x8000, scoped, tag = 'input window, operand 2, single buffered']
    #allocation7 [shape = 'u8[32768]{0}', space=vmem, size = 0x8000, scoped, tag = 'input window, operand 3, single buffered']
    #allocation8 [shape = 's32[1]{0}', space=sflag, size = 0x4, scoped, tag = 'scoped memory for tpu_custom_call.1']
    %11 = vsyncpa [#allocation3], 0
    %12 = vsyncpa [#allocation5], 0
    %13 = vsyncpa [#allocation8], 0
    // Predicated region
    $region2: #{tpu_custom_call.1} parent=1 // pred_check
      _
    $region3: #{tpu_custom_call.1} parent=1 // pred_check_branch
      %15 = sbr.rel (0) target = $region5
    $region4: #{tpu_custom_call.1} parent=1 // pred_region
      %s17 = ssub.s32 2048, 2048
      %18 = vsyncadd [#allocation3], %s17
      %s19 = sshll.u32 [#allocation2], 4
      %s20 = int_to_ptr.vmem [resolvable:$true] %s19
      %25 = dma.hbm_to_vmem [thread:$0]  %s0, 2048, %s20, [#allocation3], 128, 128, 8
    $region5: #{tpu_custom_call.1} parent=1 // pred_fallthru
      _
    // Predicated region
    $region6: #{tpu_custom_call.1} parent=1 // pred_check
      _
    $region7: #{tpu_custom_call.1} parent=1 // pred_check_branch
      %27 = sbr.rel (0) target = $region9
    $region8: #{tpu_custom_call.1} parent=1 // pred_region
      %s29 = ssub.s32 256, 256
      %30 = vsyncadd [#allocation5], %s29
      %s31 = sshll.u32 [#allocation4], 4
      %s32 = int_to_ptr.vmem [resolvable:$true] %s31
      %37 = dma.hbm_to_vmem [thread:$0]  %s1, 256, %s32, [#allocation5], 128, 128, 8
    $region9: #{tpu_custom_call.1} parent=1 // pred_fallthru
      _
    // Predicated region
    $region10: #{tpu_custom_call.1} parent=1 // pred_check
      _
    $region11: #{tpu_custom_call.1} parent=1 // pred_check_branch
      %39 = sbr.rel (0) target = $region13
    $region12: #{tpu_custom_call.1} parent=1 // pred_region
      %s41 = ssub.s32 1024, 1024
      %42 = vsyncadd [#allocation5], %s41
      %s43 = sshll.u32 [#allocation6], 4
      %s44 = int_to_ptr.vmem [resolvable:$true] %s43
      %49 = dma.hbm_to_vmem [thread:$0]  %s2, 1024, %s44, [#allocation5], 64, 64, 4
    $region13: #{tpu_custom_call.1} parent=1 // pred_fallthru
      _
    // Predicated region
    $region14: #{tpu_custom_call.1} parent=1 // pred_check
      _
    $region15: #{tpu_custom_call.1} parent=1 // pred_check_branch
      %51 = sbr.rel (0) target = $region17
    $region16: #{tpu_custom_call.1} parent=1 // pred_region
      %s53 = ssub.s32 1024, 1024
      %54 = vsyncadd [#allocation8], %s53
      %s55 = sshll.u32 [#allocation7], 4
      %s56 = int_to_ptr.vmem [resolvable:$true] %s55
      %61 = dma.hbm_to_vmem [thread:$0]  %s3, 1024, %s56, [#allocation8], 64, 64, 4
    $region17: #{tpu_custom_call.1} parent=1 // pred_fallthru
      _
    // Predicated region
    $region18: #{tpu_custom_call.1} parent=1 // pred_check
      _
    $region19: #{tpu_custom_call.1} parent=1 // pred_check_branch
      %63 = sbr.rel (0) target = $region21
    $region20: #{tpu_custom_call.1} parent=1 // pred_region
      _
    $region21: #{tpu_custom_call.1} parent=1 // pred_fallthru
      _
    // Predicated region
    $region22: #{tpu_custom_call.1} parent=1 // pred_check
      _
    $region23: #{tpu_custom_call.1} parent=1 // pred_check_branch
      %65 = sbr.rel (0) target = $region25
    $region24: #{tpu_custom_call.1} parent=1 // pred_region
      _
    $region25: #{tpu_custom_call.1} parent=1 // pred_fallthru
      _
    // Predicated region
    $region26: #{tpu_custom_call.1} parent=1 // pred_check
      _
    $region27: #{tpu_custom_call.1} parent=1 // pred_check_branch
      %67 = sbr.rel (0) target = $region29
    $region28: #{tpu_custom_call.1} parent=1 // pred_region
      %68 = dma.done [#allocation3], 2048
    $region29: #{tpu_custom_call.1} parent=1 // pred_fallthru
      _
    // Predicated region
    $region30: #{tpu_custom_call.1} parent=1 // pred_check
      _
    $region31: #{tpu_custom_call.1} parent=1 // pred_check_branch
      %70 = sbr.rel (0) target = $region33
    $region32: #{tpu_custom_call.1} parent=1 // pred_region
      %71 = dma.done [#allocation5], 256
    $region33: #{tpu_custom_call.1} parent=1 // pred_fallthru
      _
    // Predicated region
    $region34: #{tpu_custom_call.1} parent=1 // pred_check
      _
    $region35: #{tpu_custom_call.1} parent=1 // pred_check_branch
      %73 = sbr.rel (0) target = $region37
    $region36: #{tpu_custom_call.1} parent=1 // pred_region
      %74 = dma.done [#allocation5], 1024
    $region37: #{tpu_custom_call.1} parent=1 // pred_fallthru
      _
    // Predicated region
    $region38: #{tpu_custom_call.1} parent=1 // pred_check
      _
    $region39: #{tpu_custom_call.1} parent=1 // pred_check_branch
      %76 = sbr.rel (0) target = $region41
    $region40: #{tpu_custom_call.1} parent=1 // pred_region
      %77 = dma.done [#allocation8], 1024
    $region41: #{tpu_custom_call.1} parent=1 // pred_fallthru
      _
    %v79 = vld [vmem:[#allocation2] sm:$0xff]
    %v80 = vld [vmem:[#allocation2 + $0x8] sm:$0xff]
    %v81 = vld [vmem:[#allocation2 + $0x10] sm:$0xff]
    %v82 = vld [vmem:[#allocation2 + $0x18] sm:$0xff]
    %v83 = vld [vmem:[#allocation2 + $0x20] sm:$0xff]
    %v84 = vld [vmem:[#allocation2 + $0x28] sm:$0xff]
    %v85 = vld [vmem:[#allocation2 + $0x30] sm:$0xff]
    %v86 = vld [vmem:[#allocation2 + $0x38] sm:$0xff]
    %v87 = vld [vmem:[#allocation2 + $0x40] sm:$0xff]
    %v88 = vld [vmem:[#allocation2 + $0x48] sm:$0xff]
    %v89 = vld [vmem:[#allocation2 + $0x50] sm:$0xff]
    %v90 = vld [vmem:[#allocation2 + $0x58] sm:$0xff]
    %v91 = vld [vmem:[#allocation2 + $0x60] sm:$0xff]
    %v92 = vld [vmem:[#allocation2 + $0x68] sm:$0xff]
    %v93 = vld [vmem:[#allocation2 + $0x70] sm:$0xff]
    %v94 = vld [vmem:[#allocation2 + $0x78] sm:$0xff]
    %v95 = vpack.c.bf16 %v80, %v79
    %v96 = vpack.c.bf16 %v82, %v81
    %v97 = vpack.c.bf16 %v84, %v83
    %v98 = vpack.c.bf16 %v86, %v85
    %v99 = vpack.c.bf16 %v88, %v87
    %v100 = vpack.c.bf16 %v90, %v89
    %v101 = vpack.c.bf16 %v92, %v91
    %v102 = vpack.c.bf16 %v94, %v93
    %v103 = vld [vmem:[#allocation4] sm:$0xff]
    %v104 = vld [vmem:[#allocation4 + $0x8] sm:$0xff]
    %v105 = vpack.c.bf16 %v104, %v103
    %v106 = vld [vmem:[#allocation6] sm:$0xf]
    %v107 = vld [vmem:[#allocation6 + $0x4] sm:$0xf]
    %v108 = vld [vmem:[#allocation6 + $0x8] sm:$0xf]
    %v109 = vld [vmem:[#allocation6 + $0xc] sm:$0xf]
    %v110 = vld [vmem:[#allocation6 + $0x10] sm:$0xf]
    %v111 = vld [vmem:[#allocation6 + $0x14] sm:$0xf]
    %v112 = vld [vmem:[#allocation6 + $0x18] sm:$0xf]
    %v113 = vld [vmem:[#allocation6 + $0x1c] sm:$0xf]
    %v114 = vld [vmem:[#allocation6 + $0x20] sm:$0xf]
    %v115 = vld [vmem:[#allocation6 + $0x24] sm:$0xf]
    %v116 = vld [vmem:[#allocation6 + $0x28] sm:$0xf]
    %v117 = vld [vmem:[#allocation6 + $0x2c] sm:$0xf]
    %v118 = vld [vmem:[#allocation6 + $0x30] sm:$0xf]
    %v119 = vld [vmem:[#allocation6 + $0x34] sm:$0xf]
    %v120 = vld [vmem:[#allocation6 + $0x38] sm:$0xf]
    %v121 = vld [vmem:[#allocation6 + $0x3c] sm:$0xf]
    %v138 = vunpack.c.l.b16 %v106
    %v139 = vunpack.c.l.b16 %v107
    %v140 = vunpack.c.l.b16 %v108
    %v141 = vunpack.c.l.b16 %v109
    %v142 = vunpack.c.l.b16 %v110
    %v143 = vunpack.c.l.b16 %v111
    %v144 = vunpack.c.l.b16 %v112
    %v145 = vunpack.c.l.b16 %v113
    %v146 = vunpack.c.l.b16 %v114
    %v147 = vunpack.c.l.b16 %v115
    %v148 = vunpack.c.l.b16 %v116
    %v149 = vunpack.c.l.b16 %v117
    %v150 = vunpack.c.l.b16 %v118
    %v151 = vunpack.c.l.b16 %v119
    %v152 = vunpack.c.l.b16 %v120
    %v153 = vunpack.c.l.b16 %v121
    %v154 = vpack.c.b16 %v139, %v138
    %v155 = vpack.c.b16 %v141, %v140
    %v156 = vpack.c.b16 %v143, %v142
    %v157 = vpack.c.b16 %v145, %v144
    %v158 = vpack.c.b16 %v147, %v146
    %v159 = vpack.c.b16 %v149, %v148
    %v160 = vpack.c.b16 %v151, %v150
    %v161 = vpack.c.b16 %v153, %v152
    %170 = vmatprep.subr.bf16.mxu0 0
    %171 = vmatpush1.bf16.msra.mxu0 %v154
    %172 = vmatprep.subr.bf16.mxu0 0
    %173 = vmatpush1.bf16.msra.mxu0 %v155
    %174 = vmatprep.subr.bf16.mxu0 0
    %175 = vmatpush1.bf16.msra.mxu0 %v156
    %176 = vmatprep.subr.bf16.mxu0 0
    %177 = vmatpush1.bf16.msra.mxu0 %v157
    %178 = vmatprep.subr.bf16.mxu0 0
    %179 = vmatpush1.bf16.msra.mxu0 %v158
    %180 = vmatprep.subr.bf16.mxu0 0
    %181 = vmatpush1.bf16.msra.mxu0 %v159
    %182 = vmatprep.subr.bf16.mxu0 0
    %183 = vmatpush1.bf16.msra.mxu0 %v160
    %184 = vmatprep.subr.bf16.mxu0 0
    %185 = vmatpush1.bf16.msra.mxu0 %v161
    %186 = vmatprep.subr.bf16.mxu0 0
    %187 = vmatpush1.bf16.msra.mxu0 0
    %188 = vmatprep.subr.bf16.mxu0 0
    %189 = vmatpush1.bf16.msra.mxu0 0
    %190 = vmatprep.subr.bf16.mxu0 0
    %191 = vmatpush1.bf16.msra.mxu0 0
    %192 = vmatprep.subr.bf16.mxu0 0
    %193 = vmatpush1.bf16.msra.mxu0 0
    %194 = vmatprep.subr.bf16.mxu0 0
    %195 = vmatpush1.bf16.msra.mxu0 0
    %196 = vmatprep.subr.bf16.mxu0 0
    %197 = vmatpush1.bf16.msra.mxu0 0
    %198 = vmatprep.subr.bf16.mxu0 0
    %199 = vmatpush1.bf16.msra.mxu0 0
    %200 = vmatprep.subr.bf16.mxu0 0
    %201 = vmatpush1.bf16.msra.mxu0 0
    %202 = vmatprep.mubr.bf16.mxu0 0
    %203 = vmatmul.mubr.bf16.gmra.mrb[0].mxu0 %v95
    %v204 = vpop.f32.mrb[0].mxu0
    %v205 = vadd.f32 0.0, %v204
    %v206 = vpop.f32.mrb[0].mxu0
    %v207 = vpop.f32.mrb[0].mxu0
    %v208 = vadd.f32 0.0, %v207
    %v209 = vpop.f32.mrb[0].mxu0
    %210 = vmatprep.mubr.bf16.mxu0 0
    %211 = vmatmul.mubr.bf16.gmra.mrb[0].mxu0 %v96
    %v212 = vpop.f32.mrb[0].mxu0
    %v213 = vadd.f32 0.0, %v212
    %v214 = vpop.f32.mrb[0].mxu0
    %v215 = vpop.f32.mrb[0].mxu0
    %v216 = vadd.f32 0.0, %v215
    %v217 = vpop.f32.mrb[0].mxu0
    %218 = vmatprep.mubr.bf16.mxu0 0
    %219 = vmatmul.mubr.bf16.gmra.mrb[0].mxu0 %v97
    %v220 = vpop.f32.mrb[0].mxu0
    %v221 = vadd.f32 0.0, %v220
    %v222 = vpop.f32.mrb[0].mxu0
    %v223 = vpop.f32.mrb[0].mxu0
    %v224 = vadd.f32 0.0, %v223
    %v225 = vpop.f32.mrb[0].mxu0
    %226 = vmatprep.mubr.bf16.mxu0 0
    %227 = vmatmul.mubr.bf16.gmra.mrb[0].mxu0 %v98
    %v228 = vpop.f32.mrb[0].mxu0
    %v229 = vadd.f32 0.0, %v228
    %v230 = vpop.f32.mrb[0].mxu0
    %v231 = vpop.f32.mrb[0].mxu0
    %v232 = vadd.f32 0.0, %v231
    %v233 = vpop.f32.mrb[0].mxu0
    %234 = vmatprep.mubr.bf16.mxu0 0
    %235 = vmatmul.mubr.bf16.gmra.mrb[0].mxu0 %v99
    %v236 = vpop.f32.mrb[0].mxu0
    %v237 = vadd.f32 0.0, %v236
    %v238 = vpop.f32.mrb[0].mxu0
    %v239 = vpop.f32.mrb[0].mxu0
    %v240 = vadd.f32 0.0, %v239
    %v241 = vpop.f32.mrb[0].mxu0
    %242 = vmatprep.mubr.bf16.mxu0 0
    %243 = vmatmul.mubr.bf16.gmra.mrb[0].mxu0 %v100
    %v244 = vpop.f32.mrb[0].mxu0
    %v245 = vadd.f32 0.0, %v244
    %v246 = vpop.f32.mrb[0].mxu0
    %v247 = vpop.f32.mrb[0].mxu0
    %v248 = vadd.f32 0.0, %v247
    %v249 = vpop.f32.mrb[0].mxu0
    %250 = vmatprep.mubr.bf16.mxu0 0
    %251 = vmatmul.mubr.bf16.gmra.mrb[0].mxu0 %v101
    %v252 = vpop.f32.mrb[0].mxu0
    %v253 = vadd.f32 0.0, %v252
    %v254 = vpop.f32.mrb[0].mxu0
    %v255 = vpop.f32.mrb[0].mxu0
    %v256 = vadd.f32 0.0, %v255
    %v257 = vpop.f32.mrb[0].mxu0
    %258 = vmatprep.mubr.bf16.mxu0 0
    %259 = vmatmul.mubr.bf16.gmra.mrb[0].mxu0 %v102
    %v260 = vpop.f32.mrb[0].mxu0
    %v261 = vadd.f32 0.0, %v260
    %v262 = vpop.f32.mrb[0].mxu0
    %v263 = vpop.f32.mrb[0].mxu0
    %v264 = vadd.f32 0.0, %v263
    %v265 = vpop.f32.mrb[0].mxu0
    %266 = vdwg.mxu0
    %v267 = vld [vmem:[#allocation7] sm:$0xf]
    %v268 = vld [vmem:[#allocation7 + $0x4] sm:$0xf]
    %v269 = vld [vmem:[#allocation7 + $0x8] sm:$0xf]
    %v270 = vld [vmem:[#allocation7 + $0xc] sm:$0xf]
    %v271 = vld [vmem:[#allocation7 + $0x10] sm:$0xf]
    %v272 = vld [vmem:[#allocation7 + $0x14] sm:$0xf]
    %v273 = vld [vmem:[#allocation7 + $0x18] sm:$0xf]
    %v274 = vld [vmem:[#allocation7 + $0x1c] sm:$0xf]
    %v275 = vld [vmem:[#allocation7 + $0x20] sm:$0xf]
    %v276 = vld [vmem:[#allocation7 + $0x24] sm:$0xf]
    %v277 = vld [vmem:[#allocation7 + $0x28] sm:$0xf]
    %v278 = vld [vmem:[#allocation7 + $0x2c] sm:$0xf]
    %v279 = vld [vmem:[#allocation7 + $0x30] sm:$0xf]
    %v280 = vld [vmem:[#allocation7 + $0x34] sm:$0xf]
    %v281 = vld [vmem:[#allocation7 + $0x38] sm:$0xf]
    %v282 = vld [vmem:[#allocation7 + $0x3c] sm:$0xf]
    %v283 = vld [vmem:[%s4] sm:$0x1]
    %v285 = vlaneseq
    %v286 = vshrl.u32 %v285, 7
    %v287 = vsub.s32 0, %v286
    %v288 = vrot.slane %v283, %v287
    %v306 = vunpack.c.l.b16 %v267
    %v307 = vunpack.c.l.b16 %v268
    %v308 = vunpack.c.l.b16 %v269
    %v309 = vunpack.c.l.b16 %v270
    %v310 = vunpack.c.l.b16 %v271
    %v311 = vunpack.c.l.b16 %v272
    %v312 = vunpack.c.l.b16 %v273
    %v313 = vunpack.c.l.b16 %v274
    %v314 = vunpack.c.l.b16 %v275
    %v315 = vunpack.c.l.b16 %v276
    %v316 = vunpack.c.l.b16 %v277
    %v317 = vunpack.c.l.b16 %v278
    %v318 = vunpack.c.l.b16 %v279
    %v319 = vunpack.c.l.b16 %v280
    %v320 = vunpack.c.l.b16 %v281
    %v321 = vunpack.c.l.b16 %v282
    %v322 = vpack.c.b16 %v307, %v306
    %v323 = vpack.c.b16 %v309, %v308
    %v324 = vpack.c.b16 %v311, %v310
    %v325 = vpack.c.b16 %v313, %v312
    %v326 = vpack.c.b16 %v315, %v314
    %v327 = vpack.c.b16 %v317, %v316
    %v328 = vpack.c.b16 %v319, %v318
    %v329 = vpack.c.b16 %v321, %v320
    %338 = vmatprep.subr.bf16.mxu0 0
    %339 = vmatpush1.bf16.msra.mxu0 %v322
    %340 = vmatprep.subr.bf16.mxu0 0
    %341 = vmatpush1.bf16.msra.mxu0 %v323
    %342 = vmatprep.subr.bf16.mxu0 0
    %343 = vmatpush1.bf16.msra.mxu0 %v324
    %344 = vmatprep.subr.bf16.mxu0 0
    %345 = vmatpush1.bf16.msra.mxu0 %v325
    %346 = vmatprep.subr.bf16.mxu0 0
    %347 = vmatpush1.bf16.msra.mxu0 %v326
    %348 = vmatprep.subr.bf16.mxu0 0
    %349 = vmatpush1.bf16.msra.mxu0 %v327
    %350 = vmatprep.subr.bf16.mxu0 0
    %351 = vmatpush1.bf16.msra.mxu0 %v328
    %352 = vmatprep.subr.bf16.mxu0 0
    %353 = vmatpush1.bf16.msra.mxu0 %v329
    %354 = vmatprep.subr.bf16.mxu0 0
    %355 = vmatpush1.bf16.msra.mxu0 0
    %356 = vmatprep.subr.bf16.mxu0 0
    %357 = vmatpush1.bf16.msra.mxu0 0
    %358 = vmatprep.subr.bf16.mxu0 0
    %359 = vmatpush1.bf16.msra.mxu0 0
    %360 = vmatprep.subr.bf16.mxu0 0
    %361 = vmatpush1.bf16.msra.mxu0 0
    %362 = vmatprep.subr.bf16.mxu0 0
    %363 = vmatpush1.bf16.msra.mxu0 0
    %364 = vmatprep.subr.bf16.mxu0 0
    %365 = vmatpush1.bf16.msra.mxu0 0
    %366 = vmatprep.subr.bf16.mxu0 0
    %367 = vmatpush1.bf16.msra.mxu0 0
    %368 = vmatprep.subr.bf16.mxu0 0
    %369 = vmatpush1.bf16.msra.mxu0 0
    %370 = vmatprep.mubr.bf16.mxu0 0
    %371 = vmatmul.mubr.bf16.gmra.mrb[0].mxu0 %v105
    %v372 = vpop.f32.mrb[0].mxu0
    %v373 = vadd.f32 %v288, %v372
    %v374 = vpop.f32.mrb[0].mxu0
    %v375 = vpop.f32.mrb[0].mxu0
    %v376 = vadd.f32 %v288, %v375
    %v377 = vpop.f32.mrb[0].mxu0
    %378 = vdwg.mxu0
    %v381 = vcombine.high %v373, %v373
    %v383 = vunpack.c.l.s4 1966171168
    %v384 = vunpack.c.0.s8 %v383
    %v385 = vlaneseq
    %v386 = vshrl.u32 %v385, 7
    %v387 = vsub.s32 %v384, %v386
    %v388 = vrot.slane %v373, %v387
    %v390 = vunpack.c.l.s4 1966171168
    %v391 = vunpack.c.0.s8 %v390
    %v392 = vlaneseq
    %v393 = vshrl.u32 %v392, 7
    %v394 = vsub.s32 %v391, %v393
    %v395 = vrot.slane %v381, %v394
    %v396 = vcombine.high %v388, %v388
    %v397 = vcombine.high %v395, %v395
    %v399 = vunpack.c.l.s4 1966171168
    %v400 = vunpack.c.0.s8 %v399
    %v401 = vlaneseq
    %v402 = vshrl.u32 %v401, 7
    %v403 = vsub.s32 %v400, %v402
    %v404 = vrot.slane %v388, %v403
    %v406 = vunpack.c.l.s4 1966171168
    %v407 = vunpack.c.0.s8 %v406
    %v408 = vlaneseq
    %v409 = vshrl.u32 %v408, 7
    %v410 = vsub.s32 %v407, %v409
    %v411 = vrot.slane %v395, %v410
    %v413 = vunpack.c.l.s4 1966171168
    %v414 = vunpack.c.0.s8 %v413
    %v415 = vlaneseq
    %v416 = vshrl.u32 %v415, 7
    %v417 = vsub.s32 %v414, %v416
    %v418 = vrot.slane %v396, %v417
    %v420 = vunpack.c.l.s4 1966171168
    %v421 = vunpack.c.0.s8 %v420
    %v422 = vlaneseq
    %v423 = vshrl.u32 %v422, 7
    %v424 = vsub.s32 %v421, %v423
    %v425 = vrot.slane %v397, %v424
    %v426 = vcombine.high %v404, %v404
    %v427 = vcombine.high %v411, %v411
    %v428 = vcombine.high %v418, %v418
    %v429 = vcombine.high %v425, %v425
    %v430 = vcombine.high %v376, %v376
    %v432 = vunpack.c.l.s4 1966171168
    %v433 = vunpack.c.0.s8 %v432
    %v434 = vlaneseq
    %v435 = vshrl.u32 %v434, 7
    %v436 = vsub.s32 %v433, %v435
    %v437 = vrot.slane %v376, %v436
    %v439 = vunpack.c.l.s4 1966171168
    %v440 = vunpack.c.0.s8 %v439
    %v441 = vlaneseq
    %v442 = vshrl.u32 %v441, 7
    %v443 = vsub.s32 %v440, %v442
    %v444 = vrot.slane %v430, %v443
    %v445 = vcombine.high %v437, %v437
    %v446 = vcombine.high %v444, %v444
    %v448 = vunpack.c.l.s4 1966171168
    %v449 = vunpack.c.0.s8 %v448
    %v450 = vlaneseq
    %v451 = vshrl.u32 %v450, 7
    %v452 = vsub.s32 %v449, %v451
    %v453 = vrot.slane %v437, %v452
    %v455 = vunpack.c.l.s4 1966171168
    %v456 = vunpack.c.0.s8 %v455
    %v457 = vlaneseq
    %v458 = vshrl.u32 %v457, 7
    %v459 = vsub.s32 %v456, %v458
    %v460 = vrot.slane %v444, %v459
    %v462 = vunpack.c.l.s4 1966171168
    %v463 = vunpack.c.0.s8 %v462
    %v464 = vlaneseq
    %v465 = vshrl.u32 %v464, 7
    %v466 = vsub.s32 %v463, %v465
    %v467 = vrot.slane %v445, %v466
    %v469 = vunpack.c.l.s4 1966171168
    %v470 = vunpack.c.0.s8 %v469
    %v471 = vlaneseq
    %v472 = vshrl.u32 %v471, 7
    %v473 = vsub.s32 %v470, %v472
    %v474 = vrot.slane %v446, %v473
    %v475 = vcombine.high %v453, %v453
    %v476 = vcombine.high %v460, %v460
    %v477 = vcombine.high %v467, %v467
    %v478 = vcombine.high %v474, %v474
    %v479 = vlaneseq
    %v480 = vshrl.u32 %v479, 7
    %v481 = vsub.s32 0, %v480
    %v482 = vrot.slane %v404, %v481
    %v483 = vlaneseq
    %v484 = vshrl.u32 %v483, 7
    %v485 = vsub.s32 0, %v484
    %v486 = vrot.slane %v418, %v485
    %v487 = vlaneseq
    %v488 = vshrl.u32 %v487, 7
    %v489 = vsub.s32 0, %v488
    %v490 = vrot.slane %v426, %v489
    %v491 = vlaneseq
    %v492 = vshrl.u32 %v491, 7
    %v493 = vsub.s32 0, %v492
    %v494 = vrot.slane %v428, %v493
    %v495 = vlaneseq
    %v496 = vshrl.u32 %v495, 7
    %v497 = vsub.s32 0, %v496
    %v498 = vrot.slane %v411, %v497
    %v499 = vlaneseq
    %v500 = vshrl.u32 %v499, 7
    %v501 = vsub.s32 0, %v500
    %v502 = vrot.slane %v425, %v501
    %v503 = vlaneseq
    %v504 = vshrl.u32 %v503, 7
    %v505 = vsub.s32 0, %v504
    %v506 = vrot.slane %v427, %v505
    %v507 = vlaneseq
    %v508 = vshrl.u32 %v507, 7
    %v509 = vsub.s32 0, %v508
    %v510 = vrot.slane %v429, %v509
    %v511 = vlaneseq
    %v512 = vshrl.u32 %v511, 7
    %v513 = vsub.s32 0, %v512
    %v514 = vrot.slane %v453, %v513
    %v515 = vlaneseq
    %v516 = vshrl.u32 %v515, 7
    %v517 = vsub.s32 0, %v516
    %v518 = vrot.slane %v467, %v517
    %v519 = vlaneseq
    %v520 = vshrl.u32 %v519, 7
    %v521 = vsub.s32 0, %v520
    %v522 = vrot.slane %v475, %v521
    %v523 = vlaneseq
    %v524 = vshrl.u32 %v523, 7
    %v525 = vsub.s32 0, %v524
    %v526 = vrot.slane %v477, %v525
    %v527 = vlaneseq
    %v528 = vshrl.u32 %v527, 7
    %v529 = vsub.s32 0, %v528
    %v530 = vrot.slane %v460, %v529
    %v531 = vlaneseq
    %v532 = vshrl.u32 %v531, 7
    %v533 = vsub.s32 0, %v532
    %v534 = vrot.slane %v474, %v533
    %v535 = vlaneseq
    %v536 = vshrl.u32 %v535, 7
    %v537 = vsub.s32 0, %v536
    %v538 = vrot.slane %v476, %v537
    %v539 = vlaneseq
    %v540 = vshrl.u32 %v539, 7
    %v541 = vsub.s32 0, %v540
    %v542 = vrot.slane %v478, %v541
    %v559 = vadd.f32 %v205, %v482
    %v560 = vadd.f32 %v208, %v486
    %v561 = vadd.f32 %v213, %v490
    %v562 = vadd.f32 %v216, %v494
    %v563 = vadd.f32 %v221, %v498
    %v564 = vadd.f32 %v224, %v502
    %v565 = vadd.f32 %v229, %v506
    %v566 = vadd.f32 %v232, %v510
    %v567 = vadd.f32 %v237, %v514
    %v568 = vadd.f32 %v240, %v518
    %v569 = vadd.f32 %v245, %v522
    %v570 = vadd.f32 %v248, %v526
    %v571 = vadd.f32 %v253, %v530
    %v572 = vadd.f32 %v256, %v534
    %v573 = vadd.f32 %v261, %v538
    %v574 = vadd.f32 %v264, %v542
    %v575 = vtanh.pop %v559
    %v576 = vtanh.pop %v560
    %v577 = vtanh.pop %v561
    %v578 = vtanh.pop %v562
    %v579 = vtanh.pop %v563
    %v580 = vtanh.pop %v564
    %v581 = vtanh.pop %v565
    %v582 = vtanh.pop %v566
    %v583 = vtanh.pop %v567
    %v584 = vtanh.pop %v568
    %v585 = vtanh.pop %v569
    %v586 = vtanh.pop %v570
    %v587 = vtanh.pop %v571
    %v588 = vtanh.pop %v572
    %v589 = vtanh.pop %v573
    %v590 = vtanh.pop %v574
    %v591 = vld [vmem:[%s5] sm:$0x1]
    %v593 = vlaneseq
    %v594 = vshrl.u32 %v593, 7
    %v595 = vsub.s32 0, %v594
    %v596 = vrot.slane %v591, %v595
    %v598 = vmul.f32 %v575, %v596
    %v599 = vmul.f32 %v576, %v596
    %v600 = vmul.f32 %v577, %v596
    %v601 = vmul.f32 %v578, %v596
    %v602 = vmul.f32 %v579, %v596
    %v603 = vmul.f32 %v580, %v596
    %v604 = vmul.f32 %v581, %v596
    %v605 = vmul.f32 %v582, %v596
    %v606 = vmul.f32 %v583, %v596
    %v607 = vmul.f32 %v584, %v596
    %v608 = vmul.f32 %v585, %v596
    %v609 = vmul.f32 %v586, %v596
    %v610 = vmul.f32 %v587, %v596
    %v611 = vmul.f32 %v588, %v596
    %v612 = vmul.f32 %v589, %v596
    %v613 = vmul.f32 %v590, %v596
    %614 = vadd.xlane.f32.xlu0 %v598
    %v615 = vpop.xlane.xlu0 %614
    %616 = vadd.xlane.f32.xlu0 %v599
    %v617 = vpop.xlane.xlu0 %616
    %618 = vadd.xlane.f32.xlu0 %v600
    %v619 = vpop.xlane.xlu0 %618
    %620 = vadd.xlane.f32.xlu0 %v601
    %v621 = vpop.xlane.xlu0 %620
    %622 = vadd.xlane.f32.xlu0 %v602
    %v623 = vpop.xlane.xlu0 %622
    %624 = vadd.xlane.f32.xlu0 %v603
    %v625 = vpop.xlane.xlu0 %624
    %626 = vadd.xlane.f32.xlu0 %v604
    %v627 = vpop.xlane.xlu0 %626
    %628 = vadd.xlane.f32.xlu0 %v605
    %v629 = vpop.xlane.xlu0 %628
    %630 = vadd.xlane.f32.xlu0 %v606
    %v631 = vpop.xlane.xlu0 %630
    %632 = vadd.xlane.f32.xlu0 %v607
    %v633 = vpop.xlane.xlu0 %632
    %634 = vadd.xlane.f32.xlu0 %v608
    %v635 = vpop.xlane.xlu0 %634
    %636 = vadd.xlane.f32.xlu0 %v609
    %v637 = vpop.xlane.xlu0 %636
    %638 = vadd.xlane.f32.xlu0 %v610
    %v639 = vpop.xlane.xlu0 %638
    %640 = vadd.xlane.f32.xlu0 %v611
    %v641 = vpop.xlane.xlu0 %640
    %642 = vadd.xlane.f32.xlu0 %v612
    %v643 = vpop.xlane.xlu0 %642
    %644 = vadd.xlane.f32.xlu0 %v613
    %v645 = vpop.xlane.xlu0 %644
    %v662 = vlaneseq
    %v663 = vand.u32 %v662, 127
    %v664 = vlaneseq
    %v665 = vshrl.u32 %v664, 7
    %v666 = vsub.s32 %v663, %v665
    %v667 = vrot.slane %v615, %v666
    %v668 = vlaneseq
    %v669 = vshrl.u32 %v668, 7
    %v670 = vsub.s32 %v663, %v669
    %v671 = vrot.slane %v617, %v670
    %v672 = vlaneseq
    %v673 = vshrl.u32 %v672, 7
    %v674 = vsub.s32 %v663, %v673
    %v675 = vrot.slane %v619, %v674
    %v676 = vlaneseq
    %v677 = vshrl.u32 %v676, 7
    %v678 = vsub.s32 %v663, %v677
    %v679 = vrot.slane %v621, %v678
    %v680 = vlaneseq
    %v681 = vshrl.u32 %v680, 7
    %v682 = vsub.s32 %v663, %v681
    %v683 = vrot.slane %v623, %v682
    %v684 = vlaneseq
    %v685 = vshrl.u32 %v684, 7
    %v686 = vsub.s32 %v663, %v685
    %v687 = vrot.slane %v625, %v686
    %v688 = vlaneseq
    %v689 = vshrl.u32 %v688, 7
    %v690 = vsub.s32 %v663, %v689
    %v691 = vrot.slane %v627, %v690
    %v692 = vlaneseq
    %v693 = vshrl.u32 %v692, 7
    %v694 = vsub.s32 %v663, %v693
    %v695 = vrot.slane %v629, %v694
    %v696 = vlaneseq
    %v697 = vshrl.u32 %v696, 7
    %v698 = vsub.s32 %v663, %v697
    %v699 = vrot.slane %v631, %v698
    %v700 = vlaneseq
    %v701 = vshrl.u32 %v700, 7
    %v702 = vsub.s32 %v663, %v701
    %v703 = vrot.slane %v633, %v702
    %v704 = vlaneseq
    %v705 = vshrl.u32 %v704, 7
    %v706 = vsub.s32 %v663, %v705
    %v707 = vrot.slane %v635, %v706
    %v708 = vlaneseq
    %v709 = vshrl.u32 %v708, 7
    %v710 = vsub.s32 %v663, %v709
    %v711 = vrot.slane %v637, %v710
    %v712 = vlaneseq
    %v713 = vshrl.u32 %v712, 7
    %v714 = vsub.s32 %v663, %v713
    %v715 = vrot.slane %v639, %v714
    %v716 = vlaneseq
    %v717 = vshrl.u32 %v716, 7
    %v718 = vsub.s32 %v663, %v717
    %v719 = vrot.slane %v641, %v718
    %v720 = vlaneseq
    %v721 = vshrl.u32 %v720, 7
    %v722 = vsub.s32 %v663, %v721
    %v723 = vrot.slane %v643, %v722
    %v724 = vlaneseq
    %v725 = vshrl.u32 %v724, 7
    %v726 = vsub.s32 %v663, %v725
    %v727 = vrot.slane %v645, %v726
    %vm728 = vcmask 1041409
    %v729 = vsel %vm728, %v671, %v667
    %vm730 = vcmask 1042434
    %v731 = vsel %vm730, %v675, %v729
    %vm732 = vcmask 1043459
    %v733 = vsel %vm732, %v679, %v731
    %vm734 = vcmask 1044484
    %v735 = vsel %vm734, %v683, %v733
    %vm736 = vcmask 1045509
    %v737 = vsel %vm736, %v687, %v735
    %vm738 = vcmask 1046534
    %v739 = vsel %vm738, %v691, %v737
    %vm740 = vcmask 1047559
    %v741 = vsel %vm740, %v695, %v739
    %v742 = vsel %vm728, %v703, %v699
    %v743 = vsel %vm730, %v707, %v742
    %v744 = vsel %vm732, %v711, %v743
    %v745 = vsel %vm734, %v715, %v744
    %v746 = vsel %vm736, %v719, %v745
    %v747 = vsel %vm738, %v723, %v746
    %v748 = vsel %vm740, %v727, %v747
    %vm751 = vcmask 64512
    %v752 = vsel %vm751, %v741, -inf
    %753 = vmax.xlane.f32.xlu0 %v752
    %v754 = vpop.xlane.xlu0 %753
    %v755 = vsel %vm751, %v748, -inf
    %756 = vmax.xlane.f32.xlu0 %v755
    %v757 = vpop.xlane.xlu0 %756
    %v760 = vlaneseq
    %v761 = vshrl.u32 %v760, 7
    %v762 = vsub.s32 0, %v761
    %v763 = vrot.slane %v754, %v762
    %v764 = vlaneseq
    %v765 = vshrl.u32 %v764, 7
    %v766 = vsub.s32 1, %v765
    %v767 = vrot.slane %v754, %v766
    %v768 = vlaneseq
    %v769 = vshrl.u32 %v768, 7
    %v770 = vsub.s32 2, %v769
    %v771 = vrot.slane %v754, %v770
    %v772 = vlaneseq
    %v773 = vshrl.u32 %v772, 7
    %v774 = vsub.s32 3, %v773
    %v775 = vrot.slane %v754, %v774
    %v776 = vlaneseq
    %v777 = vshrl.u32 %v776, 7
    %v778 = vsub.s32 4, %v777
    %v779 = vrot.slane %v754, %v778
    %v780 = vlaneseq
    %v781 = vshrl.u32 %v780, 7
    %v782 = vsub.s32 5, %v781
    %v783 = vrot.slane %v754, %v782
    %v784 = vlaneseq
    %v785 = vshrl.u32 %v784, 7
    %v786 = vsub.s32 6, %v785
    %v787 = vrot.slane %v754, %v786
    %v788 = vlaneseq
    %v789 = vshrl.u32 %v788, 7
    %v790 = vsub.s32 7, %v789
    %v791 = vrot.slane %v754, %v790
    %v792 = vlaneseq
    %v793 = vshrl.u32 %v792, 7
    %v794 = vsub.s32 0, %v793
    %v795 = vrot.slane %v757, %v794
    %v796 = vlaneseq
    %v797 = vshrl.u32 %v796, 7
    %v798 = vsub.s32 1, %v797
    %v799 = vrot.slane %v757, %v798
    %v800 = vlaneseq
    %v801 = vshrl.u32 %v800, 7
    %v802 = vsub.s32 2, %v801
    %v803 = vrot.slane %v757, %v802
    %v804 = vlaneseq
    %v805 = vshrl.u32 %v804, 7
    %v806 = vsub.s32 3, %v805
    %v807 = vrot.slane %v757, %v806
    %v808 = vlaneseq
    %v809 = vshrl.u32 %v808, 7
    %v810 = vsub.s32 4, %v809
    %v811 = vrot.slane %v757, %v810
    %v812 = vlaneseq
    %v813 = vshrl.u32 %v812, 7
    %v814 = vsub.s32 5, %v813
    %v815 = vrot.slane %v757, %v814
    %v816 = vlaneseq
    %v817 = vshrl.u32 %v816, 7
    %v818 = vsub.s32 6, %v817
    %v819 = vrot.slane %v757, %v818
    %v820 = vlaneseq
    %v821 = vshrl.u32 %v820, 7
    %v822 = vsub.s32 7, %v821
    %v823 = vrot.slane %v757, %v822
    %v840 = vsub.f32 %v615, %v763
    %v841 = vsub.f32 %v617, %v767
    %v842 = vsub.f32 %v619, %v771
    %v843 = vsub.f32 %v621, %v775
    %v844 = vsub.f32 %v623, %v779
    %v845 = vsub.f32 %v625, %v783
    %v846 = vsub.f32 %v627, %v787
    %v847 = vsub.f32 %v629, %v791
    %v848 = vsub.f32 %v631, %v795
    %v849 = vsub.f32 %v633, %v799
    %v850 = vsub.f32 %v635, %v803
    %v851 = vsub.f32 %v637, %v807
    %v852 = vsub.f32 %v639, %v811
    %v853 = vsub.f32 %v641, %v815
    %v854 = vsub.f32 %v643, %v819
    %v855 = vsub.f32 %v645, %v823
    %v856 = vmul.f32 %v840, 1.442695
    %v857 = vpow.pop %v856
    %v858 = vmul.f32 %v841, 1.442695
    %v859 = vpow.pop %v858
    %v860 = vmul.f32 %v842, 1.442695
    %v861 = vpow.pop %v860
    %v862 = vmul.f32 %v843, 1.442695
    %v863 = vpow.pop %v862
    %v864 = vmul.f32 %v844, 1.442695
    %v865 = vpow.pop %v864
    %v866 = vmul.f32 %v845, 1.442695
    %v867 = vpow.pop %v866
    %v868 = vmul.f32 %v846, 1.442695
    %v869 = vpow.pop %v868
    %v870 = vmul.f32 %v847, 1.442695
    %v871 = vpow.pop %v870
    %v872 = vmul.f32 %v848, 1.442695
    %v873 = vpow.pop %v872
    %v874 = vmul.f32 %v849, 1.442695
    %v875 = vpow.pop %v874
    %v876 = vmul.f32 %v850, 1.442695
    %v877 = vpow.pop %v876
    %v878 = vmul.f32 %v851, 1.442695
    %v879 = vpow.pop %v878
    %v880 = vmul.f32 %v852, 1.442695
    %v881 = vpow.pop %v880
    %v882 = vmul.f32 %v853, 1.442695
    %v883 = vpow.pop %v882
    %v884 = vmul.f32 %v854, 1.442695
    %v885 = vpow.pop %v884
    %v886 = vmul.f32 %v855, 1.442695
    %v887 = vpow.pop %v886
    %904 = vset.pattern.permute.xlu0 0
    %905 = vperm.xlu0 %904, %v857
    %v906 = vpop.permute.xlu0 %905
    %907 = vset.pattern.permute.xlu0 0
    %908 = vperm.xlu0 %907, %v859
    %v909 = vpop.permute.xlu0 %908
    %910 = vset.pattern.permute.xlu0 0
    %911 = vperm.xlu0 %910, %v861
    %v912 = vpop.permute.xlu0 %911
    %913 = vset.pattern.permute.xlu0 0
    %914 = vperm.xlu0 %913, %v863
    %v915 = vpop.permute.xlu0 %914
    %916 = vset.pattern.permute.xlu0 0
    %917 = vperm.xlu0 %916, %v865
    %v918 = vpop.permute.xlu0 %917
    %919 = vset.pattern.permute.xlu0 0
    %920 = vperm.xlu0 %919, %v867
    %v921 = vpop.permute.xlu0 %920
    %922 = vset.pattern.permute.xlu0 0
    %923 = vperm.xlu0 %922, %v869
    %v924 = vpop.permute.xlu0 %923
    %925 = vset.pattern.permute.xlu0 0
    %926 = vperm.xlu0 %925, %v871
    %v927 = vpop.permute.xlu0 %926
    %928 = vset.pattern.permute.xlu0 0
    %929 = vperm.xlu0 %928, %v873
    %v930 = vpop.permute.xlu0 %929
    %931 = vset.pattern.permute.xlu0 0
    %932 = vperm.xlu0 %931, %v875
    %v933 = vpop.permute.xlu0 %932
    %934 = vset.pattern.permute.xlu0 0
    %935 = vperm.xlu0 %934, %v877
    %v936 = vpop.permute.xlu0 %935
    %937 = vset.pattern.permute.xlu0 0
    %938 = vperm.xlu0 %937, %v879
    %v939 = vpop.permute.xlu0 %938
    %940 = vset.pattern.permute.xlu0 0
    %941 = vperm.xlu0 %940, %v881
    %v942 = vpop.permute.xlu0 %941
    %943 = vset.pattern.permute.xlu0 0
    %944 = vperm.xlu0 %943, %v883
    %v945 = vpop.permute.xlu0 %944
    %946 = vset.pattern.permute.xlu0 0
    %947 = vperm.xlu0 %946, %v885
    %v948 = vpop.permute.xlu0 %947
    %949 = vset.pattern.permute.xlu0 0
    %950 = vperm.xlu0 %949, %v887
    %v951 = vpop.permute.xlu0 %950
    %v952 = vlaneseq
    %v953 = vshrl.u32 %v952, 7
    %v954 = vsub.s32 %v663, %v953
    %v955 = vrot.slane %v906, %v954
    %v956 = vlaneseq
    %v957 = vshrl.u32 %v956, 7
    %v958 = vsub.s32 %v663, %v957
    %v959 = vrot.slane %v909, %v958
    %v960 = vlaneseq
    %v961 = vshrl.u32 %v960, 7
    %v962 = vsub.s32 %v663, %v961
    %v963 = vrot.slane %v912, %v962
    %v964 = vlaneseq
    %v965 = vshrl.u32 %v964, 7
    %v966 = vsub.s32 %v663, %v965
    %v967 = vrot.slane %v915, %v966
    %v968 = vlaneseq
    %v969 = vshrl.u32 %v968, 7
    %v970 = vsub.s32 %v663, %v969
    %v971 = vrot.slane %v918, %v970
    %v972 = vlaneseq
    %v973 = vshrl.u32 %v972, 7
    %v974 = vsub.s32 %v663, %v973
    %v975 = vrot.slane %v921, %v974
    %v976 = vlaneseq
    %v977 = vshrl.u32 %v976, 7
    %v978 = vsub.s32 %v663, %v977
    %v979 = vrot.slane %v924, %v978
    %v980 = vlaneseq
    %v981 = vshrl.u32 %v980, 7
    %v982 = vsub.s32 %v663, %v981
    %v983 = vrot.slane %v927, %v982
    %v984 = vlaneseq
    %v985 = vshrl.u32 %v984, 7
    %v986 = vsub.s32 %v663, %v985
    %v987 = vrot.slane %v930, %v986
    %v988 = vlaneseq
    %v989 = vshrl.u32 %v988, 7
    %v990 = vsub.s32 %v663, %v989
    %v991 = vrot.slane %v933, %v990
    %v992 = vlaneseq
    %v993 = vshrl.u32 %v992, 7
    %v994 = vsub.s32 %v663, %v993
    %v995 = vrot.slane %v936, %v994
    %v996 = vlaneseq
    %v997 = vshrl.u32 %v996, 7
    %v998 = vsub.s32 %v663, %v997
    %v999 = vrot.slane %v939, %v998
    %v1000 = vlaneseq
    %v1001 = vshrl.u32 %v1000, 7
    %v1002 = vsub.s32 %v663, %v1001
    %v1003 = vrot.slane %v942, %v1002
    %v1004 = vlaneseq
    %v1005 = vshrl.u32 %v1004, 7
    %v1006 = vsub.s32 %v663, %v1005
    %v1007 = vrot.slane %v945, %v1006
    %v1008 = vlaneseq
    %v1009 = vshrl.u32 %v1008, 7
    %v1010 = vsub.s32 %v663, %v1009
    %v1011 = vrot.slane %v948, %v1010
    %v1012 = vlaneseq
    %v1013 = vshrl.u32 %v1012, 7
    %v1014 = vsub.s32 %v663, %v1013
    %v1015 = vrot.slane %v951, %v1014
    %v1016 = vsel %vm728, %v959, %v955
    %v1017 = vsel %vm730, %v963, %v1016
    %v1018 = vsel %vm732, %v967, %v1017
    %v1019 = vsel %vm734, %v971, %v1018
    %v1020 = vsel %vm736, %v975, %v1019
    %v1021 = vsel %vm738, %v979, %v1020
    %v1022 = vsel %vm740, %v983, %v1021
    %v1023 = vsel %vm728, %v991, %v987
    %v1024 = vsel %vm730, %v995, %v1023
    %v1025 = vsel %vm732, %v999, %v1024
    %v1026 = vsel %vm734, %v1003, %v1025
    %v1027 = vsel %vm736, %v1007, %v1026
    %v1028 = vsel %vm738, %v1011, %v1027
    %v1029 = vsel %vm740, %v1015, %v1028
    %v1032 = vsel %vm751, %v1022, 0.0
    %1033 = vadd.xlane.f32.xlu0 %v1032
    %v1034 = vpop.xlane.xlu0 %1033
    %v1035 = vsel %vm751, %v1029, 0.0
    %1036 = vadd.xlane.f32.xlu0 %v1035
    %v1037 = vpop.xlane.xlu0 %1036
    %v1040 = vlaneseq
    %v1041 = vshrl.u32 %v1040, 7
    %v1042 = vsub.s32 0, %v1041
    %v1043 = vrot.slane %v1034, %v1042
    %v1044 = vlaneseq
    %v1045 = vshrl.u32 %v1044, 7
    %v1046 = vsub.s32 1, %v1045
    %v1047 = vrot.slane %v1034, %v1046
    %v1048 = vlaneseq
    %v1049 = vshrl.u32 %v1048, 7
    %v1050 = vsub.s32 2, %v1049
    %v1051 = vrot.slane %v1034, %v1050
    %v1052 = vlaneseq
    %v1053 = vshrl.u32 %v1052, 7
    %v1054 = vsub.s32 3, %v1053
    %v1055 = vrot.slane %v1034, %v1054
    %v1056 = vlaneseq
    %v1057 = vshrl.u32 %v1056, 7
    %v1058 = vsub.s32 4, %v1057
    %v1059 = vrot.slane %v1034, %v1058
    %v1060 = vlaneseq
    %v1061 = vshrl.u32 %v1060, 7
    %v1062 = vsub.s32 5, %v1061
    %v1063 = vrot.slane %v1034, %v1062
    %v1064 = vlaneseq
    %v1065 = vshrl.u32 %v1064, 7
    %v1066 = vsub.s32 6, %v1065
    %v1067 = vrot.slane %v1034, %v1066
    %v1068 = vlaneseq
    %v1069 = vshrl.u32 %v1068, 7
    %v1070 = vsub.s32 7, %v1069
    %v1071 = vrot.slane %v1034, %v1070
    %v1072 = vlaneseq
    %v1073 = vshrl.u32 %v1072, 7
    %v1074 = vsub.s32 0, %v1073
    %v1075 = vrot.slane %v1037, %v1074
    %v1076 = vlaneseq
    %v1077 = vshrl.u32 %v1076, 7
    %v1078 = vsub.s32 1, %v1077
    %v1079 = vrot.slane %v1037, %v1078
    %v1080 = vlaneseq
    %v1081 = vshrl.u32 %v1080, 7
    %v1082 = vsub.s32 2, %v1081
    %v1083 = vrot.slane %v1037, %v1082
    %v1084 = vlaneseq
    %v1085 = vshrl.u32 %v1084, 7
    %v1086 = vsub.s32 3, %v1085
    %v1087 = vrot.slane %v1037, %v1086
    %v1088 = vlaneseq
    %v1089 = vshrl.u32 %v1088, 7
    %v1090 = vsub.s32 4, %v1089
    %v1091 = vrot.slane %v1037, %v1090
    %v1092 = vlaneseq
    %v1093 = vshrl.u32 %v1092, 7
    %v1094 = vsub.s32 5, %v1093
    %v1095 = vrot.slane %v1037, %v1094
    %v1096 = vlaneseq
    %v1097 = vshrl.u32 %v1096, 7
    %v1098 = vsub.s32 6, %v1097
    %v1099 = vrot.slane %v1037, %v1098
    %v1100 = vlaneseq
    %v1101 = vshrl.u32 %v1100, 7
    %v1102 = vsub.s32 7, %v1101
    %v1103 = vrot.slane %v1037, %v1102
    %v1120 = vrcp.pop %v1043
    %v1121 = vmul.f32 %v857, %v1120
    %v1122 = vrcp.pop %v1047
    %v1123 = vmul.f32 %v859, %v1122
    %v1124 = vrcp.pop %v1051
    %v1125 = vmul.f32 %v861, %v1124
    %v1126 = vrcp.pop %v1055
    %v1127 = vmul.f32 %v863, %v1126
    %v1128 = vrcp.pop %v1059
    %v1129 = vmul.f32 %v865, %v1128
    %v1130 = vrcp.pop %v1063
    %v1131 = vmul.f32 %v867, %v1130
    %v1132 = vrcp.pop %v1067
    %v1133 = vmul.f32 %v869, %v1132
    %v1134 = vrcp.pop %v1071
    %v1135 = vmul.f32 %v871, %v1134
    %v1136 = vrcp.pop %v1075
    %v1137 = vmul.f32 %v873, %v1136
    %v1138 = vrcp.pop %v1079
    %v1139 = vmul.f32 %v875, %v1138
    %v1140 = vrcp.pop %v1083
    %v1141 = vmul.f32 %v877, %v1140
    %v1142 = vrcp.pop %v1087
    %v1143 = vmul.f32 %v879, %v1142
    %v1144 = vrcp.pop %v1091
    %v1145 = vmul.f32 %v881, %v1144
    %v1146 = vrcp.pop %v1095
    %v1147 = vmul.f32 %v883, %v1146
    %v1148 = vrcp.pop %v1099
    %v1149 = vmul.f32 %v885, %v1148
    %v1150 = vrcp.pop %v1103
    %v1151 = vmul.f32 %v887, %v1150
    %1168 = vset.pattern.permute.xlu0 0
    %1169 = vperm.xlu0 %1168, %v1121
    %v1170 = vpop.permute.xlu0 %1169
    %1171 = vset.pattern.permute.xlu0 0
    %1172 = vperm.xlu0 %1171, %v1123
    %v1173 = vpop.permute.xlu0 %1172
    %1174 = vset.pattern.permute.xlu0 0
    %1175 = vperm.xlu0 %1174, %v1125
    %v1176 = vpop.permute.xlu0 %1175
    %1177 = vset.pattern.permute.xlu0 0
    %1178 = vperm.xlu0 %1177, %v1127
    %v1179 = vpop.permute.xlu0 %1178
    %1180 = vset.pattern.permute.xlu0 0
    %1181 = vperm.xlu0 %1180, %v1129
    %v1182 = vpop.permute.xlu0 %1181
    %1183 = vset.pattern.permute.xlu0 0
    %1184 = vperm.xlu0 %1183, %v1131
    %v1185 = vpop.permute.xlu0 %1184
    %1186 = vset.pattern.permute.xlu0 0
    %1187 = vperm.xlu0 %1186, %v1133
    %v1188 = vpop.permute.xlu0 %1187
    %1189 = vset.pattern.permute.xlu0 0
    %1190 = vperm.xlu0 %1189, %v1135
    %v1191 = vpop.permute.xlu0 %1190
    %1192 = vset.pattern.permute.xlu0 0
    %1193 = vperm.xlu0 %1192, %v1137
    %v1194 = vpop.permute.xlu0 %1193
    %1195 = vset.pattern.permute.xlu0 0
    %1196 = vperm.xlu0 %1195, %v1139
    %v1197 = vpop.permute.xlu0 %1196
    %1198 = vset.pattern.permute.xlu0 0
    %1199 = vperm.xlu0 %1198, %v1141
    %v1200 = vpop.permute.xlu0 %1199
    %1201 = vset.pattern.permute.xlu0 0
    %1202 = vperm.xlu0 %1201, %v1143
    %v1203 = vpop.permute.xlu0 %1202
    %1204 = vset.pattern.permute.xlu0 0
    %1205 = vperm.xlu0 %1204, %v1145
    %v1206 = vpop.permute.xlu0 %1205
    %1207 = vset.pattern.permute.xlu0 0
    %1208 = vperm.xlu0 %1207, %v1147
    %v1209 = vpop.permute.xlu0 %1208
    %1210 = vset.pattern.permute.xlu0 0
    %1211 = vperm.xlu0 %1210, %v1149
    %v1212 = vpop.permute.xlu0 %1211
    %1213 = vset.pattern.permute.xlu0 0
    %1214 = vperm.xlu0 %1213, %v1151
    %v1215 = vpop.permute.xlu0 %1214
    %v1216 = vlaneseq
    %v1217 = vshrl.u32 %v1216, 7
    %v1218 = vsub.s32 %v663, %v1217
    %v1219 = vrot.slane %v1170, %v1218
    %v1220 = vlaneseq
    %v1221 = vshrl.u32 %v1220, 7
    %v1222 = vsub.s32 %v663, %v1221
    %v1223 = vrot.slane %v1173, %v1222
    %v1224 = vlaneseq
    %v1225 = vshrl.u32 %v1224, 7
    %v1226 = vsub.s32 %v663, %v1225
    %v1227 = vrot.slane %v1176, %v1226
    %v1228 = vlaneseq
    %v1229 = vshrl.u32 %v1228, 7
    %v1230 = vsub.s32 %v663, %v1229
    %v1231 = vrot.slane %v1179, %v1230
    %v1232 = vlaneseq
    %v1233 = vshrl.u32 %v1232, 7
    %v1234 = vsub.s32 %v663, %v1233
    %v1235 = vrot.slane %v1182, %v1234
    %v1236 = vlaneseq
    %v1237 = vshrl.u32 %v1236, 7
    %v1238 = vsub.s32 %v663, %v1237
    %v1239 = vrot.slane %v1185, %v1238
    %v1240 = vlaneseq
    %v1241 = vshrl.u32 %v1240, 7
    %v1242 = vsub.s32 %v663, %v1241
    %v1243 = vrot.slane %v1188, %v1242
    %v1244 = vlaneseq
    %v1245 = vshrl.u32 %v1244, 7
    %v1246 = vsub.s32 %v663, %v1245
    %v1247 = vrot.slane %v1191, %v1246
    %v1248 = vlaneseq
    %v1249 = vshrl.u32 %v1248, 7
    %v1250 = vsub.s32 %v663, %v1249
    %v1251 = vrot.slane %v1194, %v1250
    %v1252 = vlaneseq
    %v1253 = vshrl.u32 %v1252, 7
    %v1254 = vsub.s32 %v663, %v1253
    %v1255 = vrot.slane %v1197, %v1254
    %v1256 = vlaneseq
    %v1257 = vshrl.u32 %v1256, 7
    %v1258 = vsub.s32 %v663, %v1257
    %v1259 = vrot.slane %v1200, %v1258
    %v1260 = vlaneseq
    %v1261 = vshrl.u32 %v1260, 7
    %v1262 = vsub.s32 %v663, %v1261
    %v1263 = vrot.slane %v1203, %v1262
    %v1264 = vlaneseq
    %v1265 = vshrl.u32 %v1264, 7
    %v1266 = vsub.s32 %v663, %v1265
    %v1267 = vrot.slane %v1206, %v1266
    %v1268 = vlaneseq
    %v1269 = vshrl.u32 %v1268, 7
    %v1270 = vsub.s32 %v663, %v1269
    %v1271 = vrot.slane %v1209, %v1270
    %v1272 = vlaneseq
    %v1273 = vshrl.u32 %v1272, 7
    %v1274 = vsub.s32 %v663, %v1273
    %v1275 = vrot.slane %v1212, %v1274
    %v1276 = vlaneseq
    %v1277 = vshrl.u32 %v1276, 7
    %v1278 = vsub.s32 %v663, %v1277
    %v1279 = vrot.slane %v1215, %v1278
    %v1280 = vsel %vm728, %v1223, %v1219
    %v1281 = vsel %vm730, %v1227, %v1280
    %v1282 = vsel %vm732, %v1231, %v1281
    %v1283 = vsel %vm734, %v1235, %v1282
    %v1284 = vsel %vm736, %v1239, %v1283
    %v1285 = vsel %vm738, %v1243, %v1284
    %v1286 = vsel %vm740, %v1247, %v1285
    %v1287 = vsel %vm728, %v1255, %v1251
    %v1288 = vsel %vm730, %v1259, %v1287
    %v1289 = vsel %vm732, %v1263, %v1288
    %v1290 = vsel %vm734, %v1267, %v1289
    %v1291 = vsel %vm736, %v1271, %v1290
    %v1292 = vsel %vm738, %v1275, %v1291
    %v1293 = vsel %vm740, %v1279, %v1292
    %1296 = vst.msk [vmem:[%s6] sm:$0xff] %vm751, %v1286
    %1297 = vst.msk [vmem:[%s6 + $0x8] sm:$0xff] %vm751, %v1293
    // Predicated region
    $region42: #{tpu_custom_call.1} parent=1 // pred_check
      _
    $region43: #{tpu_custom_call.1} parent=1 // pred_check_branch
      %1299 = sbr.rel (0) target = $region45
    $region44: #{tpu_custom_call.1} parent=1 // pred_region
      _
    $region45: #{tpu_custom_call.1} parent=1 // pred_fallthru
      _
    // Predicated region
    $region46: #{tpu_custom_call.1} parent=1 // pred_check
      _
    $region47: #{tpu_custom_call.1} parent=1 // pred_check_branch
      %1301 = sbr.rel (0) target = $region49
    $region48: #{tpu_custom_call.1} parent=1 // pred_region
      _
    $region49: #{tpu_custom_call.1} parent=1 // pred_fallthru
      _
    %1302 = vsyncpa [#allocation3], 1
    %1303 = vsyncpa [#allocation5], 1
    %1304 = vsyncpa [#allocation8], 1

</llo_original>
